<compile_context>
chip_gen: v5e
topology: v5e:2x2
jax: 0.10.0
libtpu: 0.0.40
codegen_flags: <defaults>
</compile_context>

<pallas_src>
import functools

import jax
import jax.numpy as jnp
from jax import lax
from jax.experimental import pallas as pl
from jax.experimental.pallas import tpu as pltpu

_LANE = 128


def _round_up(x, m):
    return ((x + m - 1) // m) * m


def _lr_kernel(cat_ref, num_ref, p_ref, o_ref, *, fc, fn):
    """Fused LinearRegression forward for one batch tile.

    cat_ref: [TILE_B, Fc] int    raw categorical indices (cast in-kernel)
    num_ref: [TILE_B, Fn] int    raw numerical values    (cast in-kernel)
    p_ref:   [1, Fc+Fn+1] f32    packed [w_cat / field_dims | w_num | bias]
    o_ref:   [1, 1, TILE_B] f32  lane-dense sigmoid(logit) row for this tile
    """
    cat_f = cat_ref[...].astype(jnp.float32)       # [TILE_B, Fc]  (free VPU cast)
    num_f = num_ref[...].astype(jnp.float32)       # [TILE_B, Fn]

    wc = p_ref[:, :fc]                             # [1, Fc] (pre-scaled by 1/dims)
    wn = p_ref[:, fc:fc + fn]                      # [1, Fn]
    b = p_ref[:, fc + fn:]                         # [1, 1]

    # Contract the feature (last) axis of both operands: the per-row logits come
    # out lane-major as [1, TILE_B], which feeds dense, unmasked output stores.
    # These two tiny matmuls ride the otherwise-idle MXU.
    dnums = (((1,), (1,)), ((), ()))
    logit = lax.dot_general(wc, cat_f, dnums, preferred_element_type=jnp.float32)
    logit = logit + lax.dot_general(wn, num_f, dnums,
                                    preferred_element_type=jnp.float32)
    logit = logit + b                              # [1, TILE_B]

    o_ref[...] = jax.nn.sigmoid(logit).reshape(1, 1, -1)


def linear_regression_forward(categorical_x, categorical_field_dims, numerical_x,
                              weight, bias, *, tile_b=None):
    """
    categorical_x:          int [B, Fc]   ("Long tensor" indices; int16 also fine)
    categorical_field_dims: int/float [Fc]
    numerical_x:            int/float [B, Fn]
    weight:                 float32 [Fc + Fn, 1]  (categorical rows first,
                                                   matching torch.cat([cat, num], 1))
    bias:                   float32 []
    returns: [sigmoid(logit)] with logit of shape [B, 1]
    """
    B, Fc = categorical_x.shape
    Fn = numerical_x.shape[1]

    # Fold 1/field_dims into the categorical weight rows (O(Fc) one-time op) and
    # pack everything into a single small parameter row.
    dims_f = jnp.asarray(categorical_field_dims, jnp.float32)         # [Fc]
    w = jnp.asarray(weight, jnp.float32)
    w_cat_row = (w[:Fc, 0] / dims_f)[None, :]                          # [1, Fc]
    w_num_row = w[Fc:, 0][None, :]                                     # [1, Fn]
    b_row = jnp.asarray(bias, jnp.float32).reshape(1, 1)               # [1, 1]
    params = jnp.concatenate([w_cat_row, w_num_row, b_row], axis=1)    # [1, Fc+Fn+1]

    # Tile selection: largest lane-aligned tile (<= 2048) to amortize per-step
    # overhead; keep >= 2 grid steps (each >= 512 rows) when the batch allows so
    # both v7x TensorCores get work under dimension_semantics=("parallel",).
    if tile_b is None:
        tile_b = min(2048, _round_up(B, _LANE))
        if B >= 2 * 512:
            tile_b = min(tile_b, _round_up(pl.cdiv(B, 2), _LANE))
    tile_b = max(_LANE, min(_round_up(tile_b, _LANE), _round_up(B, _LANE)))

    nb = pl.cdiv(B, tile_b)
    Bp = nb * tile_b
    if Bp != B:
        categorical_x = jnp.pad(categorical_x, ((0, Bp - B), (0, 0)))
        numerical_x = jnp.pad(numerical_x, ((0, Bp - B), (0, 0)))

    # NOTE: if the data pipeline can emit a single fused int16 [B, Fc+Fn] feature
    # array, the two feature inputs below collapse to one DMA stream + one dot.
    kernel = functools.partial(_lr_kernel, fc=Fc, fn=Fn)
    out = pl.pallas_call(
        kernel,
        out_shape=jax.ShapeDtypeStruct((nb, 1, tile_b), jnp.float32),
        grid=(nb,),
        in_specs=[
            pl.BlockSpec((tile_b, Fc), lambda i: (i, 0)),
            pl.BlockSpec((tile_b, Fn), lambda i: (i, 0)),
            pl.BlockSpec((1, Fc + Fn + 1), lambda i: (0, 0)),   # grid-invariant params
        ],
        out_specs=pl.BlockSpec((1, 1, tile_b), lambda i: (i, 0, 0)),
        compiler_params=pltpu.CompilerParams(
            dimension_semantics=("parallel",)),     # shard batch across TCs on v7x
        cost_estimate=pl.CostEstimate(
            flops=2 * Bp * (Fc + Fn),
            transcendentals=2 * Bp,                 # exp + reciprocal per sigmoid
            bytes_accessed=(categorical_x.dtype.itemsize * Bp * Fc
                            + numerical_x.dtype.itemsize * Bp * Fn
                            + 4 * Bp                 # output row
                            + 4 * (Fc + Fn + 1))),   # packed params
    )(categorical_x, numerical_x, params)

    # (nb, 1, tile_b) -> (Bp, 1) is a contiguous reshape; slice off batch padding.
    return [out.reshape(Bp, 1)[:B]]


if __name__ == "__main__":
    key = jax.random.PRNGKey(0)
    k_cat, k_num, k_w, k_b = jax.random.split(key, 4)

    # Small shapes consistent with the module: 24 categorical fields, 2 numerical.
    B = 256
    categorical_field_dims = jnp.array(
        [7, 13, 101, 50, 9, 3, 29, 11, 17, 23, 5, 8,
         64, 32, 19, 41, 6, 15, 27, 10, 33, 12, 4, 21],
        dtype=jnp.int32,
    )
    Fc = categorical_field_dims.shape[0]
    Fn = 2

    # "Long tensor" inputs -> int32; indices bounded by their field dims
    # (as the embedding-style module implies). Kernel casts to f32 internally.
    categorical_x = (
        jax.random.randint(k_cat, (B, Fc), 0, 1_000_000, dtype=jnp.int32)
        % categorical_field_dims[None, :]
    )
    numerical_x = jax.random.randint(k_num, (B, Fn), 0, 10, dtype=jnp.int32)

    # Deterministic Linear(Fc + Fn, 1) parameters (weight stored as [in_features, 1]).
    weight = jax.random.normal(k_w, (Fc + Fn, 1), dtype=jnp.float32) * 0.1
    bias = jax.random.normal(k_b, (), dtype=jnp.float32) * 0.1

    result = linear_regression_forward(
        categorical_x, categorical_field_dims, numerical_x, weight, bias
    )
    jax.block_until_ready(result[0])

    # Pure-JAX reference (same math as the PyTorch module; elementwise f32 so it
    # is exact). Tolerance allows for possible bf16 MXU passes inside the kernel.
    feats = jnp.concatenate(
        [categorical_x.astype(jnp.float32)
         / categorical_field_dims.astype(jnp.float32)[None, :],
         numerical_x.astype(jnp.float32)],
        axis=1,
    )
    ref = jax.nn.sigmoid(
        jnp.sum(feats * weight[:, 0][None, :], axis=1, keepdims=True) + bias
    )
    assert result[0].shape == (B, 1)
    assert jnp.allclose(result[0], ref, atol=1e-2), "mismatch vs reference"

    print("KERNEL_OK")
</pallas_src>

<mosaic_0001>
module attributes {stable_mosaic.version = 11 : i64} {
  func.func @_lr_kernel(%arg0: i32, %arg1: memref<256x24xi32, #tpu.memory_space<vmem>>, %arg2: memref<256x2xi32, #tpu.memory_space<vmem>>, %arg3: memref<1x27xf32, #tpu.memory_space<vmem>>, %arg4: memref<1x1x256xf32, #tpu.memory_space<vmem>>) attributes {dimension_semantics = [#tpu.dimension_semantics<parallel>], iteration_bounds = array<i64: 1>, scalar_prefetch = 0 : i64, scratch_operands = 0 : i64, tpu.core_type = #tpu.core_type<tc>, window_params = [{transform_indices = @transform_0, window_bounds = array<i64: 256, 24>}, {transform_indices = @transform_1, window_bounds = array<i64: 256, 2>}, {pipeline_mode = #tpu.pipeline_mode<synchronous>, transform_indices = @transform_2, window_bounds = array<i64: 1, 27>}, {transform_indices = @transform_3, window_bounds = array<i64: 1, 1, 256>}]} {
    %c0 = arith.constant 0 : index
    %c0_0 = arith.constant 0 : index
    %0 = vector.load %arg1[%c0, %c0_0] : memref<256x24xi32, #tpu.memory_space<vmem>>, vector<256x24xi32>
    %1 = arith.sitofp %0 : vector<256x24xi32> to vector<256x24xf32>
    %c0_1 = arith.constant 0 : index
    %c0_2 = arith.constant 0 : index
    %2 = vector.load %arg2[%c0_1, %c0_2] : memref<256x2xi32, #tpu.memory_space<vmem>>, vector<256x2xi32>
    %3 = arith.sitofp %2 : vector<256x2xi32> to vector<256x2xf32>
    %c0_3 = arith.constant 0 : index
    %c0_4 = arith.constant 0 : index
    %4 = vector.load %arg3[%c0_3, %c0_4] : memref<1x27xf32, #tpu.memory_space<vmem>>, vector<1x24xf32>
    %c0_5 = arith.constant 0 : index
    %c24 = arith.constant 24 : index
    %5 = vector.load %arg3[%c0_5, %c24] : memref<1x27xf32, #tpu.memory_space<vmem>>, vector<1x2xf32>
    %c0_6 = arith.constant 0 : index
    %c26 = arith.constant 26 : index
    %6 = vector.load %arg3[%c0_6, %c26] : memref<1x27xf32, #tpu.memory_space<vmem>>, vector<1x1xf32>
    %cst = arith.constant dense<0.000000e+00> : vector<1x256xf32>
    %7 = tpu.matmul %4, %1, %cst {dimension_numbers = #tpu.dot_dimension_numbers<[1], [1], [0], [0], [0, 0, 1, 0], [], []>} : vector<1x24xf32>, vector<256x24xf32>, vector<1x256xf32> -> vector<1x256xf32>
    %cst_7 = arith.constant dense<0.000000e+00> : vector<1x256xf32>
    %8 = tpu.matmul %5, %3, %cst_7 {dimension_numbers = #tpu.dot_dimension_numbers<[1], [1], [0], [0], [0, 0, 1, 0], [], []>} : vector<1x2xf32>, vector<256x2xf32>, vector<1x256xf32> -> vector<1x256xf32>
    %9 = arith.addf %7, %8 : vector<1x256xf32>
    %10 = vector.broadcast %6 : vector<1x1xf32> to vector<1x256xf32>
    %11 = arith.addf %9, %10 : vector<1x256xf32>
    %12 = arith.negf %11 : vector<1x256xf32>
    %13 = math.exp %12 : vector<1x256xf32>
    %cst_8 = arith.constant 1.000000e+00 : f32
    %14 = vector.broadcast %cst_8 : f32 to vector<1x256xf32>
    %15 = arith.addf %14, %13 : vector<1x256xf32>
    %16 = arith.divf %14, %15 : vector<1x256xf32>
    %17 = vector.shape_cast %16 : vector<1x256xf32> to vector<1x1x256xf32>
    %c0_9 = arith.constant 0 : index
    %c0_10 = arith.constant 0 : index
    %c0_11 = arith.constant 0 : index
    %18 = vector.load %arg4[%c0_9, %c0_10, %c0_11] : memref<1x1x256xf32, #tpu.memory_space<vmem>>, vector<1x1x256xf32>
    tpu.vector_store %arg4[%c0_9, %c0_10, %c0_11], %17 {strides = array<i32>} : memref<1x1x256xf32, #tpu.memory_space<vmem>>, vector<1x1x256xf32>,
    return
  }
  func.func @transform_0(%arg0: i32) -> (i32, i32) {
    %c0_i32 = arith.constant 0 : i32
    %c0_i32_0 = arith.constant 0 : i32
    return %arg0, %c0_i32 : i32, i32
  }
  func.func @transform_1(%arg0: i32) -> (i32, i32) {
    %c0_i32 = arith.constant 0 : i32
    %c0_i32_0 = arith.constant 0 : i32
    return %arg0, %c0_i32 : i32, i32
  }
  func.func @transform_2(%arg0: i32) -> (i32, i32) {
    %c0_i32 = arith.constant 0 : i32
    %c0_i32_0 = arith.constant 0 : i32
    %c0_i32_1 = arith.constant 0 : i32
    return %c0_i32, %c0_i32_0 : i32, i32
  }
  func.func @transform_3(%arg0: i32) -> (i32, i32, i32) {
    %c0_i32 = arith.constant 0 : i32
    %c0_i32_0 = arith.constant 0 : i32
    %c0_i32_1 = arith.constant 0 : i32
    return %arg0, %c0_i32, %c0_i32_0 : i32, i32, i32
  }
}

</mosaic_0001>

<llo_original>
// kernel: tpu_custom_call.1
$region0: #{tpu_custom_call.1}
  #allocation0 [shape = 'u32[]', space=smem, size = 0x4, offset = 0x4, fixed_abs, tag = 'smem constant byte address 0x4 - core index']
  #allocation1 [shape = 'u32[72,128]{1,0:T(1,128)}', space=vmem, size = 0x9000, scoped, tag = 'internal scratch']
  %s0 = inlined_call_operand.vmem [shape: s32[256,24], index: 0, kind: input, shape index: {}]
  %s1 = inlined_call_operand.vmem [shape: s32[256,2], index: 1, kind: input, shape index: {}]
  %s2 = inlined_call_operand.vmem [shape: f32[1,27], index: 2, kind: input, shape index: {}]
  %s3 = inlined_call_operand.hbm [shape: f32[1,1,256], index: 3, kind: output, shape index: {}]
  %s4 = sld [smem:[#allocation0]]
  $region22: #{tpu_custom_call.1} parent=0
    _
  %s6 = ssub.s32 1, %s4
  %s7 = scalar_select 0, %s6, %s4
  $region1: #{tpu_custom_call.1} parent=0
    #allocation2 [shape = 'u8[1024]{0}', space=vmem, size = 0x400, scoped, tag = 'output window, operand 0, single buffered']
    #allocation3 [shape = 's32[1]{0}', space=sflag, size = 0x4, scoped, tag = 'scoped memory for tpu_custom_call.1']
    %8 = vsyncpa [#allocation3], 0
    // Predicated region
    $region2: #{tpu_custom_call.1} parent=1 // pred_check
      _
    $region3: #{tpu_custom_call.1} parent=1 // pred_check_branch
      %10 = sbr.rel (0) target = $region5
    $region4: #{tpu_custom_call.1} parent=1 // pred_region
      _
    $region5: #{tpu_custom_call.1} parent=1 // pred_fallthru
      _
    // Predicated region
    $region6: #{tpu_custom_call.1} parent=1 // pred_check
      _
    $region7: #{tpu_custom_call.1} parent=1 // pred_check_branch
      %12 = sbr.rel (0) target = $region9
    $region8: #{tpu_custom_call.1} parent=1 // pred_region
      _
    $region9: #{tpu_custom_call.1} parent=1 // pred_fallthru
      _
    // Predicated region
    $region10: #{tpu_custom_call.1} parent=1 // pred_check
      _
    $region11: #{tpu_custom_call.1} parent=1 // pred_check_branch
      %14 = sbr.rel (0) target = $region13
    $region12: #{tpu_custom_call.1} parent=1 // pred_region
      _
    $region13: #{tpu_custom_call.1} parent=1 // pred_fallthru
      _
    %v15 = vld [vmem:[%s0] sm:$0xff]
    %v16 = vld [vmem:[%s0 + $0x8] sm:$0xff]
    %v17 = vld [vmem:[%s0 + $0x10] sm:$0xff]
    %v18 = vld [vmem:[%s0 + $0x18] sm:$0xff]
    %v19 = vld [vmem:[%s0 + $0x20] sm:$0xff]
    %v20 = vld [vmem:[%s0 + $0x28] sm:$0xff]
    %v21 = vld [vmem:[%s0 + $0x30] sm:$0xff]
    %v22 = vld [vmem:[%s0 + $0x38] sm:$0xff]
    %v23 = vld [vmem:[%s0 + $0x40] sm:$0xff]
    %v24 = vld [vmem:[%s0 + $0x48] sm:$0xff]
    %v25 = vld [vmem:[%s0 + $0x50] sm:$0xff]
    %v26 = vld [vmem:[%s0 + $0x58] sm:$0xff]
    %v27 = vld [vmem:[%s0 + $0x60] sm:$0xff]
    %v28 = vld [vmem:[%s0 + $0x68] sm:$0xff]
    %v29 = vld [vmem:[%s0 + $0x70] sm:$0xff]
    %v30 = vld [vmem:[%s0 + $0x78] sm:$0xff]
    %v31 = vld [vmem:[%s0 + $0x80] sm:$0xff]
    %v32 = vld [vmem:[%s0 + $0x88] sm:$0xff]
    %v33 = vld [vmem:[%s0 + $0x90] sm:$0xff]
    %v34 = vld [vmem:[%s0 + $0x98] sm:$0xff]
    %v35 = vld [vmem:[%s0 + $0xa0] sm:$0xff]
    %v36 = vld [vmem:[%s0 + $0xa8] sm:$0xff]
    %v37 = vld [vmem:[%s0 + $0xb0] sm:$0xff]
    %v38 = vld [vmem:[%s0 + $0xb8] sm:$0xff]
    %v39 = vld [vmem:[%s0 + $0xc0] sm:$0xff]
    %v40 = vld [vmem:[%s0 + $0xc8] sm:$0xff]
    %v41 = vld [vmem:[%s0 + $0xd0] sm:$0xff]
    %v42 = vld [vmem:[%s0 + $0xd8] sm:$0xff]
    %v43 = vld [vmem:[%s0 + $0xe0] sm:$0xff]
    %v44 = vld [vmem:[%s0 + $0xe8] sm:$0xff]
    %v45 = vld [vmem:[%s0 + $0xf0] sm:$0xff]
    %v46 = vld [vmem:[%s0 + $0xf8] sm:$0xff]
    %v47 = vcvt.s32.f32 %v15
    %v48 = vcvt.s32.f32 %v16
    %v49 = vcvt.s32.f32 %v17
    %v50 = vcvt.s32.f32 %v18
    %v51 = vcvt.s32.f32 %v19
    %v52 = vcvt.s32.f32 %v20
    %v53 = vcvt.s32.f32 %v21
    %v54 = vcvt.s32.f32 %v22
    %v55 = vcvt.s32.f32 %v23
    %v56 = vcvt.s32.f32 %v24
    %v57 = vcvt.s32.f32 %v25
    %v58 = vcvt.s32.f32 %v26
    %v59 = vcvt.s32.f32 %v27
    %v60 = vcvt.s32.f32 %v28
    %v61 = vcvt.s32.f32 %v29
    %v62 = vcvt.s32.f32 %v30
    %v63 = vcvt.s32.f32 %v31
    %v64 = vcvt.s32.f32 %v32
    %v65 = vcvt.s32.f32 %v33
    %v66 = vcvt.s32.f32 %v34
    %v67 = vcvt.s32.f32 %v35
    %v68 = vcvt.s32.f32 %v36
    %v69 = vcvt.s32.f32 %v37
    %v70 = vcvt.s32.f32 %v38
    %v71 = vcvt.s32.f32 %v39
    %v72 = vcvt.s32.f32 %v40
    %v73 = vcvt.s32.f32 %v41
    %v74 = vcvt.s32.f32 %v42
    %v75 = vcvt.s32.f32 %v43
    %v76 = vcvt.s32.f32 %v44
    %v77 = vcvt.s32.f32 %v45
    %v78 = vcvt.s32.f32 %v46
    %v79 = vld [vmem:[%s1] sm:$0xff]
    %v80 = vld [vmem:[%s1 + $0x8] sm:$0xff]
    %v81 = vld [vmem:[%s1 + $0x10] sm:$0xff]
    %v82 = vld [vmem:[%s1 + $0x18] sm:$0xff]
    %v83 = vld [vmem:[%s1 + $0x20] sm:$0xff]
    %v84 = vld [vmem:[%s1 + $0x28] sm:$0xff]
    %v85 = vld [vmem:[%s1 + $0x30] sm:$0xff]
    %v86 = vld [vmem:[%s1 + $0x38] sm:$0xff]
    %v87 = vld [vmem:[%s1 + $0x40] sm:$0xff]
    %v88 = vld [vmem:[%s1 + $0x48] sm:$0xff]
    %v89 = vld [vmem:[%s1 + $0x50] sm:$0xff]
    %v90 = vld [vmem:[%s1 + $0x58] sm:$0xff]
    %v91 = vld [vmem:[%s1 + $0x60] sm:$0xff]
    %v92 = vld [vmem:[%s1 + $0x68] sm:$0xff]
    %v93 = vld [vmem:[%s1 + $0x70] sm:$0xff]
    %v94 = vld [vmem:[%s1 + $0x78] sm:$0xff]
    %v95 = vld [vmem:[%s1 + $0x80] sm:$0xff]
    %v96 = vld [vmem:[%s1 + $0x88] sm:$0xff]
    %v97 = vld [vmem:[%s1 + $0x90] sm:$0xff]
    %v98 = vld [vmem:[%s1 + $0x98] sm:$0xff]
    %v99 = vld [vmem:[%s1 + $0xa0] sm:$0xff]
    %v100 = vld [vmem:[%s1 + $0xa8] sm:$0xff]
    %v101 = vld [vmem:[%s1 + $0xb0] sm:$0xff]
    %v102 = vld [vmem:[%s1 + $0xb8] sm:$0xff]
    %v103 = vld [vmem:[%s1 + $0xc0] sm:$0xff]
    %v104 = vld [vmem:[%s1 + $0xc8] sm:$0xff]
    %v105 = vld [vmem:[%s1 + $0xd0] sm:$0xff]
    %v106 = vld [vmem:[%s1 + $0xd8] sm:$0xff]
    %v107 = vld [vmem:[%s1 + $0xe0] sm:$0xff]
    %v108 = vld [vmem:[%s1 + $0xe8] sm:$0xff]
    %v109 = vld [vmem:[%s1 + $0xf0] sm:$0xff]
    %v110 = vld [vmem:[%s1 + $0xf8] sm:$0xff]
    %v111 = vcvt.s32.f32 %v79
    %v112 = vcvt.s32.f32 %v80
    %v113 = vcvt.s32.f32 %v81
    %v114 = vcvt.s32.f32 %v82
    %v115 = vcvt.s32.f32 %v83
    %v116 = vcvt.s32.f32 %v84
    %v117 = vcvt.s32.f32 %v85
    %v118 = vcvt.s32.f32 %v86
    %v119 = vcvt.s32.f32 %v87
    %v120 = vcvt.s32.f32 %v88
    %v121 = vcvt.s32.f32 %v89
    %v122 = vcvt.s32.f32 %v90
    %v123 = vcvt.s32.f32 %v91
    %v124 = vcvt.s32.f32 %v92
    %v125 = vcvt.s32.f32 %v93
    %v126 = vcvt.s32.f32 %v94
    %v127 = vcvt.s32.f32 %v95
    %v128 = vcvt.s32.f32 %v96
    %v129 = vcvt.s32.f32 %v97
    %v130 = vcvt.s32.f32 %v98
    %v131 = vcvt.s32.f32 %v99
    %v132 = vcvt.s32.f32 %v100
    %v133 = vcvt.s32.f32 %v101
    %v134 = vcvt.s32.f32 %v102
    %v135 = vcvt.s32.f32 %v103
    %v136 = vcvt.s32.f32 %v104
    %v137 = vcvt.s32.f32 %v105
    %v138 = vcvt.s32.f32 %v106
    %v139 = vcvt.s32.f32 %v107
    %v140 = vcvt.s32.f32 %v108
    %v141 = vcvt.s32.f32 %v109
    %v142 = vcvt.s32.f32 %v110
    %v143 = vld [vmem:[%s2] sm:$0x1]
    %v145 = vperm.slane %v143, 0
    %146 = vrot.lane.b32.xlu0 %v145, 104
    %v147 = vpop.permute.xlu0 %146
    %vm148 = vcmask 15360
    %v149 = vsel %vm148, %v147, 0
    %v152 = vsel %vm148, %v111, 0
    %v155 = vsel %vm148, %v112, 0
    %v158 = vsel %vm148, %v113, 0
    %v161 = vsel %vm148, %v114, 0
    %v164 = vsel %vm148, %v115, 0
    %v167 = vsel %vm148, %v116, 0
    %v170 = vsel %vm148, %v117, 0
    %v173 = vsel %vm148, %v118, 0
    %v176 = vsel %vm148, %v119, 0
    %v179 = vsel %vm148, %v120, 0
    %v182 = vsel %vm148, %v121, 0
    %v185 = vsel %vm148, %v122, 0
    %v188 = vsel %vm148, %v123, 0
    %v191 = vsel %vm148, %v124, 0
    %v194 = vsel %vm148, %v125, 0
    %v197 = vsel %vm148, %v126, 0
    %v200 = vsel %vm148, %v127, 0
    %v203 = vsel %vm148, %v128, 0
    %v206 = vsel %vm148, %v129, 0
    %v209 = vsel %vm148, %v130, 0
    %v212 = vsel %vm148, %v131, 0
    %v215 = vsel %vm148, %v132, 0
    %v218 = vsel %vm148, %v133, 0
    %v221 = vsel %vm148, %v134, 0
    %v224 = vsel %vm148, %v135, 0
    %v227 = vsel %vm148, %v136, 0
    %v230 = vsel %vm148, %v137, 0
    %v233 = vsel %vm148, %v138, 0
    %v236 = vsel %vm148, %v139, 0
    %v239 = vsel %vm148, %v140, 0
    %v242 = vsel %vm148, %v141, 0
    %v245 = vsel %vm148, %v142, 0
    %247 = vmatpush.xpose.msra.mxu0 %v197
    %248 = vmatpush.xpose.msra.mxu0 %v194
    %249 = vmatpush.xpose.msra.mxu0 %v191
    %250 = vmatpush.xpose.msra.mxu0 %v188
    %251 = vmatpush.xpose.msra.mxu0 %v185
    %252 = vmatpush.xpose.msra.mxu0 %v182
    %253 = vmatpush.xpose.msra.mxu0 %v179
    %254 = vmatpush.xpose.msra.mxu0 %v176
    %255 = vmatpush.xpose.msra.mxu0 %v173
    %256 = vmatpush.xpose.msra.mxu0 %v170
    %257 = vmatpush.xpose.msra.mxu0 %v167
    %258 = vmatpush.xpose.msra.mxu0 %v164
    %259 = vmatpush.xpose.msra.mxu0 %v161
    %260 = vmatpush.xpose.msra.mxu0 %v158
    %261 = vmatpush.xpose.msra.mxu0 %v155
    %262 = vmatpush.xpose.msra.mxu0 %v152
    %263 = vmatmul.f32.gmra.mxu0 %v149
    %v264 = vpop.f32.mrf.mxu0
    %v265 = vadd.f32 0.0, %v264
    %266 = vdwg.mxu0
    %267 = vmatpush.xpose.msra.mxu0 %v245
    %268 = vmatpush.xpose.msra.mxu0 %v242
    %269 = vmatpush.xpose.msra.mxu0 %v239
    %270 = vmatpush.xpose.msra.mxu0 %v236
    %271 = vmatpush.xpose.msra.mxu0 %v233
    %272 = vmatpush.xpose.msra.mxu0 %v230
    %273 = vmatpush.xpose.msra.mxu0 %v227
    %274 = vmatpush.xpose.msra.mxu0 %v224
    %275 = vmatpush.xpose.msra.mxu0 %v221
    %276 = vmatpush.xpose.msra.mxu0 %v218
    %277 = vmatpush.xpose.msra.mxu0 %v215
    %278 = vmatpush.xpose.msra.mxu0 %v212
    %279 = vmatpush.xpose.msra.mxu0 %v209
    %280 = vmatpush.xpose.msra.mxu0 %v206
    %281 = vmatpush.xpose.msra.mxu0 %v203
    %282 = vmatpush.xpose.msra.mxu0 %v200
    %283 = vmatmul.f32.gmra.mxu0 %v149
    %v284 = vpop.f32.mrf.mxu0
    %v285 = vadd.f32 0.0, %v284
    %286 = vdwg.mxu0
    %vm287 = vcmask 195584
    %v288 = vsel %vm287, %v143, 0
    %v291 = vsel %vm287, %v47, 0
    %v294 = vsel %vm287, %v48, 0
    %v297 = vsel %vm287, %v49, 0
    %v300 = vsel %vm287, %v50, 0
    %v303 = vsel %vm287, %v51, 0
    %v306 = vsel %vm287, %v52, 0
    %v309 = vsel %vm287, %v53, 0
    %v312 = vsel %vm287, %v54, 0
    %v315 = vsel %vm287, %v55, 0
    %v318 = vsel %vm287, %v56, 0
    %v321 = vsel %vm287, %v57, 0
    %v324 = vsel %vm287, %v58, 0
    %v327 = vsel %vm287, %v59, 0
    %v330 = vsel %vm287, %v60, 0
    %v333 = vsel %vm287, %v61, 0
    %v336 = vsel %vm287, %v62, 0
    %v339 = vsel %vm287, %v63, 0
    %v342 = vsel %vm287, %v64, 0
    %v345 = vsel %vm287, %v65, 0
    %v348 = vsel %vm287, %v66, 0
    %v351 = vsel %vm287, %v67, 0
    %v354 = vsel %vm287, %v68, 0
    %v357 = vsel %vm287, %v69, 0
    %v360 = vsel %vm287, %v70, 0
    %v363 = vsel %vm287, %v71, 0
    %v366 = vsel %vm287, %v72, 0
    %v369 = vsel %vm287, %v73, 0
    %v372 = vsel %vm287, %v74, 0
    %v375 = vsel %vm287, %v75, 0
    %v378 = vsel %vm287, %v76, 0
    %v381 = vsel %vm287, %v77, 0
    %v384 = vsel %vm287, %v78, 0
    %386 = vmatpush.xpose.msra.mxu0 %v336
    %387 = vmatpush.xpose.msra.mxu0 %v333
    %388 = vmatpush.xpose.msra.mxu0 %v330
    %389 = vmatpush.xpose.msra.mxu0 %v327
    %390 = vmatpush.xpose.msra.mxu0 %v324
    %391 = vmatpush.xpose.msra.mxu0 %v321
    %392 = vmatpush.xpose.msra.mxu0 %v318
    %393 = vmatpush.xpose.msra.mxu0 %v315
    %394 = vmatpush.xpose.msra.mxu0 %v312
    %395 = vmatpush.xpose.msra.mxu0 %v309
    %396 = vmatpush.xpose.msra.mxu0 %v306
    %397 = vmatpush.xpose.msra.mxu0 %v303
    %398 = vmatpush.xpose.msra.mxu0 %v300
    %399 = vmatpush.xpose.msra.mxu0 %v297
    %400 = vmatpush.xpose.msra.mxu0 %v294
    %401 = vmatpush.xpose.msra.mxu0 %v291
    %402 = vmatmul.f32.gmra.mxu0 %v288
    %v403 = vpop.f32.mrf.mxu0
    %v404 = vadd.f32 %v265, %v403
    %405 = vdwg.mxu0
    %406 = vmatpush.xpose.msra.mxu0 %v384
    %407 = vmatpush.xpose.msra.mxu0 %v381
    %408 = vmatpush.xpose.msra.mxu0 %v378
    %409 = vmatpush.xpose.msra.mxu0 %v375
    %410 = vmatpush.xpose.msra.mxu0 %v372
    %411 = vmatpush.xpose.msra.mxu0 %v369
    %412 = vmatpush.xpose.msra.mxu0 %v366
    %413 = vmatpush.xpose.msra.mxu0 %v363
    %414 = vmatpush.xpose.msra.mxu0 %v360
    %415 = vmatpush.xpose.msra.mxu0 %v357
    %416 = vmatpush.xpose.msra.mxu0 %v354
    %417 = vmatpush.xpose.msra.mxu0 %v351
    %418 = vmatpush.xpose.msra.mxu0 %v348
    %419 = vmatpush.xpose.msra.mxu0 %v345
    %420 = vmatpush.xpose.msra.mxu0 %v342
    %421 = vmatpush.xpose.msra.mxu0 %v339
    %422 = vmatmul.f32.gmra.mxu0 %v288
    %v423 = vpop.f32.mrf.mxu0
    %v424 = vadd.f32 %v285, %v423
    %425 = vdwg.mxu0
    %426 = vset.pattern.permute.xlu0 26
    %427 = vperm.xlu0 %426, %v143
    %v428 = vpop.permute.xlu0 %427
    %v430 = vperm.slane %v428, 0
    %v431 = vadd.f32 %v404, %v430
    %v432 = vadd.f32 %v424, %v430
    %v433 = vxor.u32 %v431, 2147483648
    %v434 = vxor.u32 %v432, 2147483648
    %v435 = vmul.f32 %v433, 1.442695
    %v436 = vpow.pop %v435
    %v437 = vmul.f32 %v434, 1.442695
    %v438 = vpow.pop %v437
    %v439 = vadd.f32 %v436, 1.0
    %v440 = vadd.f32 %v438, 1.0
    %v441 = vrcp.pop %v439
    %v442 = vmul.f32 %v439, %v441
    %v443 = vsub.f32 1.0, %v442
    %v444 = vmul.f32 %v441, %v443
    %v445 = vadd.f32 %v441, %v444
    %vm446 = vweird.f32 %v439
    %vm447 = vweird.f32 %v441
    %vm448 = vmor %vm446, %vm447
    %v449 = vsel %vm448, %v441, %v445
    %v450 = vand.u32 2147483647, %v439
    %vm451 = vcmp.eq.f32.partialorder %v450, 8.507059e+37
    %v452 = vand.u32 %v439, 2147483648
    %v453 = vor.u32 1.1754944e-38, %v452
    %v454 = vsel %vm451, %v453, %v449
    %v455 = vmul.f32 1.0, %v454
    %v456 = vrcp.pop %v440
    %v457 = vmul.f32 %v440, %v456
    %v458 = vsub.f32 1.0, %v457
    %v459 = vmul.f32 %v456, %v458
    %v460 = vadd.f32 %v456, %v459
    %vm461 = vweird.f32 %v440
    %vm462 = vweird.f32 %v456
    %vm463 = vmor %vm461, %vm462
    %v464 = vsel %vm463, %v456, %v460
    %v465 = vand.u32 2147483647, %v440
    %vm466 = vcmp.eq.f32.partialorder %v465, 8.507059e+37
    %v467 = vand.u32 %v440, 2147483648
    %v468 = vor.u32 1.1754944e-38, %v467
    %v469 = vsel %vm466, %v468, %v464
    %v470 = vmul.f32 1.0, %v469
    %v473 = vrot.slane %v470, 7
    %vm474 = vcmask 1040384
    %v475 = vsel %vm474, %v455, %v473
    %v477 = vlaneseq
    %vm478 = vcmp.ge.s32.totalorder %v477, 0
    %vm479 = vcmp.lt.s32.totalorder %v477, 256
    %vm480 = vmand %vm478, %vm479
    %481 = vst.msk [vmem:[#allocation2] sm:$0x3] %vm480, %v475
    // Predicated region
    $region14: #{tpu_custom_call.1} parent=1 // pred_check
      _
    $region15: #{tpu_custom_call.1} parent=1 // pred_check_branch
      %483 = sbr.rel (0) target = $region17
    $region16: #{tpu_custom_call.1} parent=1 // pred_region
      %485 = vsyncadd [#allocation3], 0
      %s487 = sshll.u32 [#allocation2], 4
      %s488 = int_to_ptr.vmem [resolvable:$true] %s487
      %s489 = sshll.u32 %s3, 4
      %s490 = int_to_ptr.hbm [resolvable:$true] %s489
      %492 = dma.vmem_to_hbm [thread:$0]  %s488, 32, %s490, [#allocation3]
    $region17: #{tpu_custom_call.1} parent=1 // pred_fallthru
      _
    // Predicated region
    $region18: #{tpu_custom_call.1} parent=1 // pred_check
      _
    $region19: #{tpu_custom_call.1} parent=1 // pred_check_branch
      %494 = sbr.rel (0) target = $region21
    $region20: #{tpu_custom_call.1} parent=1 // pred_region
      %496 = dma.done [#allocation3], 32
    $region21: #{tpu_custom_call.1} parent=1 // pred_fallthru
      _
    %497 = vsyncpa [#allocation3], 1

</llo_original>
